<compile_context>
chip_gen: v7x
topology: tpu7x:2x2x1
jax: 0.10.0
libtpu: 0.0.40
codegen_flags: <defaults>
</compile_context>

<pallas_src>
import jax
import jax.numpy as jnp
from jax.experimental import pallas as pl
from jax.experimental.pallas import tpu as pltpu

OUT_LANES = 128  # lane-dense output slab width


def _leaky_relu(x, slope=0.2):
    return jnp.where(x > 0, x, slope * x)


def discriminator_kernel(flat_ref, w1_ref, w2_ref, aux_ref, out_ref):
    # Whole (small) problem lives in VMEM as a single block.
    flat = flat_ref[...]                                   # (B, D)  bf16
    b1 = aux_ref[0:1, :]                                   # (1, H)  f32
    b2 = aux_ref[1:2, :]                                   # (1, H)  f32
    w3 = aux_ref[2:3, :]                                   # (1, H)  f32
    b3 = aux_ref[3:4, 0:1]                                 # (1, 1)  f32

    # Layer 1: bf16 x bf16 MXU matmul, f32 accumulate.
    h1 = jnp.dot(flat, w1_ref[...], preferred_element_type=jnp.float32)
    h1 = _leaky_relu(h1 + b1)                              # (B, H) f32

    # Layer 2: cast activation back to bf16 for the native MXU path.
    h2 = jnp.dot(h1.astype(jnp.bfloat16), w2_ref[...],
                 preferred_element_type=jnp.float32)
    h2 = _leaky_relu(h2 + b2)                              # (B, H) f32

    # Final Linear(H, 1): VPU multiply + XLU lane reduce (an N=1 MXU matmul
    # would waste 255/256 output lanes and add MRF pop latency).
    score = jnp.sum(h2 * w3, axis=-1, keepdims=True) + b3  # (B, 1) f32

    # Lane-dense, unmasked store; wrapper slices column 0.
    out_ref[...] = jnp.broadcast_to(score, out_ref.shape)


def discriminator_forward(adj, params):
    """adj: (B, N, N) float. params in kernel layout:
       w1:(D,H) bf16, w2:(H,H) bf16, aux:(4,H) f32 = [b1; b2; w3; [b3,0,...]]."""
    B, N, _ = adj.shape
    D = N * N
    flat = adj.reshape(B, D).astype(jnp.bfloat16)          # same as torch .view

    w1, w2, aux = params["w1"], params["w2"], params["aux"]
    H = w1.shape[1]

    vmem_full = lambda shape: pl.BlockSpec(shape, lambda: tuple(0 for _ in shape))

    out = pl.pallas_call(
        discriminator_kernel,
        out_shape=jax.ShapeDtypeStruct((B, OUT_LANES), jnp.float32),
        grid=(),
        in_specs=[
            vmem_full((B, D)),
            vmem_full((D, H)),
            vmem_full((H, H)),
            vmem_full((4, H)),
        ],
        out_specs=vmem_full((B, OUT_LANES)),
    )(flat, w1, w2, aux)

    # Keep only the real output column.
    return out[:, :1]


def init_params(key, n_max, hidden):
    """Synthetic nn.Linear-style init, stored directly in kernel layout:
       (in, out) weights (== torch W.T), bf16 matmul weights, and the small
       per-layer vectors packed into one (4, H) f32 array."""
    D = n_max * n_max
    k1, k2, k3, k4, k5, k6 = jax.random.split(key, 6)

    def u(k, shape, fan_in):
        bound = 1.0 / jnp.sqrt(fan_in)
        return jax.random.uniform(k, shape, jnp.float32, -bound, bound)

    w1 = u(k1, (D, hidden), D).astype(jnp.bfloat16)
    w2 = u(k3, (hidden, hidden), hidden).astype(jnp.bfloat16)

    b1 = u(k2, (hidden,), D)
    b2 = u(k4, (hidden,), hidden)
    w3 = u(k5, (hidden,), hidden)
    b3 = u(k6, (1,), hidden)
    b3_row = jnp.zeros((hidden,), jnp.float32).at[0].set(b3[0])
    aux = jnp.stack([b1, b2, w3, b3_row], axis=0)          # (4, H) f32

    return {"w1": w1, "w2": w2, "aux": aux}


if __name__ == "__main__":
    # Small shapes consistent with the module: batch=2, n_max=16 (D=256), hidden=32.
    B, N_MAX, HIDDEN = 2, 16, 32

    key = jax.random.PRNGKey(0)
    k_adj, k_par = jax.random.split(key)

    # Symmetric {0,1} adjacency-like input, float32 as the torch model expects.
    a = (jax.random.uniform(k_adj, (B, N_MAX, N_MAX)) > 0.7).astype(jnp.float32)
    adj = jnp.maximum(a, jnp.swapaxes(a, 1, 2))

    params = init_params(k_par, N_MAX, HIDDEN)

    fwd = jax.jit(discriminator_forward)
    out = jax.block_until_ready(fwd(adj, params))

    # Pure-JAX f32 reference (weights in (in, out) layout == torch W.T).
    w1f = params["w1"].astype(jnp.float32)
    w2f = params["w2"].astype(jnp.float32)
    b1 = params["aux"][0:1, :]
    b2 = params["aux"][1:2, :]
    w3 = params["aux"][2:3, :]
    b3 = params["aux"][3, 0]

    flat = adj.reshape(B, -1)
    z1 = flat @ w1f + b1
    h1 = jnp.where(z1 > 0, z1, 0.2 * z1)
    z2 = h1 @ w2f + b2
    h2 = jnp.where(z2 > 0, z2, 0.2 * z2)
    ref = jnp.sum(h2 * w3, axis=-1, keepdims=True) + b3

    assert out.shape == (B, 1)
    # bf16 matmul inputs (f32 accumulate) -> loosened tolerance per review.
    assert jnp.allclose(out, ref, atol=2e-2, rtol=2e-2)

    print("KERNEL_OK")
</pallas_src>

<mosaic_0001>
module attributes {stable_mosaic.version = 11 : i64} {
  func.func @discriminator_kernel(%arg0: memref<2x256xbf16, #tpu.memory_space<vmem>>, %arg1: memref<256x32xbf16, #tpu.memory_space<vmem>>, %arg2: memref<32x32xbf16, #tpu.memory_space<vmem>>, %arg3: memref<4x32xf32, #tpu.memory_space<vmem>>, %arg4: memref<2x128xf32, #tpu.memory_space<vmem>>) attributes {dimension_semantics = [], scalar_prefetch = 0 : i64, scratch_operands = 0 : i64, tpu.core_type = #tpu.core_type<tc>} {
    %c0 = arith.constant 0 : index
    %c0_0 = arith.constant 0 : index
    %0 = vector.load %arg0[%c0, %c0_0] : memref<2x256xbf16, #tpu.memory_space<vmem>>, vector<2x256xbf16>
    %c0_1 = arith.constant 0 : index
    %c0_2 = arith.constant 0 : index
    %1 = vector.load %arg3[%c0_1, %c0_2] : memref<4x32xf32, #tpu.memory_space<vmem>>, vector<1x32xf32>
    %c1 = arith.constant 1 : index
    %c0_3 = arith.constant 0 : index
    %2 = vector.load %arg3[%c1, %c0_3] : memref<4x32xf32, #tpu.memory_space<vmem>>, vector<1x32xf32>
    %c2 = arith.constant 2 : index
    %c0_4 = arith.constant 0 : index
    %3 = vector.load %arg3[%c2, %c0_4] : memref<4x32xf32, #tpu.memory_space<vmem>>, vector<1x32xf32>
    %c3 = arith.constant 3 : index
    %c0_5 = arith.constant 0 : index
    %4 = vector.load %arg3[%c3, %c0_5] : memref<4x32xf32, #tpu.memory_space<vmem>>, vector<1x1xf32>
    %c0_6 = arith.constant 0 : index
    %c0_7 = arith.constant 0 : index
    %5 = vector.load %arg1[%c0_6, %c0_7] : memref<256x32xbf16, #tpu.memory_space<vmem>>, vector<256x32xbf16>
    %cst = arith.constant dense<0.000000e+00> : vector<2x32xf32>
    %6 = tpu.matmul %0, %5, %cst {dimension_numbers = #tpu.dot_dimension_numbers<[1], [0], [0], [1], [0, 0, 1, 1], [], []>} : vector<2x256xbf16>, vector<256x32xbf16>, vector<2x32xf32> -> vector<2x32xf32>
    %7 = vector.broadcast %1 : vector<1x32xf32> to vector<2x32xf32>
    %8 = arith.addf %6, %7 : vector<2x32xf32>
    %cst_8 = arith.constant 0.000000e+00 : f32
    %9 = vector.broadcast %cst_8 : f32 to vector<2x32xf32>
    %10 = arith.cmpf ogt, %8, %9 : vector<2x32xf32>
    %cst_9 = arith.constant 2.000000e-01 : f32
    %11 = vector.broadcast %cst_9 : f32 to vector<2x32xf32>
    %12 = arith.mulf %11, %8 : vector<2x32xf32>
    %13 = arith.select %10, %8, %12 : vector<2x32xi1>, vector<2x32xf32>
    %14 = arith.truncf %13 : vector<2x32xf32> to vector<2x32xbf16>
    %c0_10 = arith.constant 0 : index
    %c0_11 = arith.constant 0 : index
    %15 = vector.load %arg2[%c0_10, %c0_11] : memref<32x32xbf16, #tpu.memory_space<vmem>>, vector<32x32xbf16>
    %cst_12 = arith.constant dense<0.000000e+00> : vector<2x32xf32>
    %16 = tpu.matmul %14, %15, %cst_12 {dimension_numbers = #tpu.dot_dimension_numbers<[1], [0], [0], [1], [0, 0, 1, 1], [], []>} : vector<2x32xbf16>, vector<32x32xbf16>, vector<2x32xf32> -> vector<2x32xf32>
    %17 = vector.broadcast %2 : vector<1x32xf32> to vector<2x32xf32>
    %18 = arith.addf %16, %17 : vector<2x32xf32>
    %cst_13 = arith.constant 0.000000e+00 : f32
    %19 = vector.broadcast %cst_13 : f32 to vector<2x32xf32>
    %20 = arith.cmpf ogt, %18, %19 : vector<2x32xf32>
    %cst_14 = arith.constant 2.000000e-01 : f32
    %21 = vector.broadcast %cst_14 : f32 to vector<2x32xf32>
    %22 = arith.mulf %21, %18 : vector<2x32xf32>
    %23 = arith.select %20, %18, %22 : vector<2x32xi1>, vector<2x32xf32>
    %24 = vector.broadcast %3 : vector<1x32xf32> to vector<2x32xf32>
    %25 = arith.mulf %23, %24 : vector<2x32xf32>
    %cst_15 = arith.constant dense<0.000000e+00> : vector<2xf32>
    %26 = vector.multi_reduction <add>, %25, %cst_15 [1] : vector<2x32xf32> to vector<2xf32>
    %27 = vector.shape_cast %26 : vector<2xf32> to vector<2x1xf32>
    %28 = vector.broadcast %4 : vector<1x1xf32> to vector<2x1xf32>
    %29 = arith.addf %27, %28 : vector<2x1xf32>
    %30 = vector.shape_cast %29 : vector<2x1xf32> to vector<2x1xf32>
    %31 = vector.broadcast %30 : vector<2x1xf32> to vector<2x128xf32>
    %c0_16 = arith.constant 0 : index
    %c0_17 = arith.constant 0 : index
    %32 = vector.load %arg4[%c0_16, %c0_17] : memref<2x128xf32, #tpu.memory_space<vmem>>, vector<2x128xf32>
    tpu.vector_store %arg4[%c0_16, %c0_17], %31 {strides = array<i32>} : memref<2x128xf32, #tpu.memory_space<vmem>>, vector<2x128xf32>,
    return
  }
}

</mosaic_0001>

<llo_original>
// kernel: discriminator_forward.1
$region0: #{discriminator_forward.1}
  #allocation0 [shape = 'u32[]', space=smem, size = 0x4, offset = 0x4, fixed_abs, tag = 'smem constant byte address 0x4 - core index']
  #allocation1 [shape = 'u32[144,128]{1,0:T(1,128)}', space=vmem, size = 0x12000, scoped, tag = 'internal scratch']
  %s0 = inlined_call_operand.vmem [shape: bf16[2,256], index: 0, kind: input, shape index: {}]
  %s1 = inlined_call_operand.vmem [shape: bf16[256,32], index: 1, kind: input, shape index: {}]
  %s2 = inlined_call_operand.vmem [shape: bf16[32,32], index: 2, kind: input, shape index: {}]
  %s3 = inlined_call_operand.vmem [shape: f32[4,32], index: 3, kind: input, shape index: {}]
  %s4 = inlined_call_operand.vmem [shape: f32[2,128], index: 4, kind: output, shape index: {}]
  %s5 = sld [smem:[#allocation0]]
  $region26: #{discriminator_forward.1} parent=0
    _
  %s7 = ssub.s32 1, %s5
  %s8 = scalar_select 0, %s7, %s5
  // Predicated region
  $region2: #{discriminator_forward.1} parent=0 // pred_check
    _
  $region3: #{discriminator_forward.1} parent=0 // pred_check_branch
    %10 = sbr.rel (0) target = $region5
  $region4: #{discriminator_forward.1} parent=0 // pred_region
    _
  $region5: #{discriminator_forward.1} parent=0 // pred_fallthru
    _
  // Predicated region
  $region6: #{discriminator_forward.1} parent=0 // pred_check
    _
  $region7: #{discriminator_forward.1} parent=0 // pred_check_branch
    %12 = sbr.rel (0) target = $region9
  $region8: #{discriminator_forward.1} parent=0 // pred_region
    _
  $region9: #{discriminator_forward.1} parent=0 // pred_fallthru
    _
  // Predicated region
  $region10: #{discriminator_forward.1} parent=0 // pred_check
    _
  $region11: #{discriminator_forward.1} parent=0 // pred_check_branch
    %14 = sbr.rel (0) target = $region13
  $region12: #{discriminator_forward.1} parent=0 // pred_region
    _
  $region13: #{discriminator_forward.1} parent=0 // pred_fallthru
    _
  // Predicated region
  $region14: #{discriminator_forward.1} parent=0 // pred_check
    _
  $region15: #{discriminator_forward.1} parent=0 // pred_check_branch
    %16 = sbr.rel (0) target = $region17
  $region16: #{discriminator_forward.1} parent=0 // pred_region
    _
  $region17: #{discriminator_forward.1} parent=0 // pred_fallthru
    _
  %v18 = vld [vmem:[%s0] sm:$0x3]
  %v19 = vld [vmem:[%s3] sm:$0x1]
  %v20 = vld [vmem:[%s3 + $0x1] sm:$0x1]
  %v21 = vld [vmem:[%s3 + $0x2] sm:$0x1]
  %v22 = vld [vmem:[%s3 + $0x3] sm:$0x1]
  %v23 = vld [vmem:[%s1] sm:$0xf]
  %v24 = vld [vmem:[%s1 + $0x4] sm:$0xf]
  %v25 = vld [vmem:[%s1 + $0x8] sm:$0xf]
  %v26 = vld [vmem:[%s1 + $0xc] sm:$0xf]
  %v27 = vld [vmem:[%s1 + $0x10] sm:$0xf]
  %v28 = vld [vmem:[%s1 + $0x14] sm:$0xf]
  %v29 = vld [vmem:[%s1 + $0x18] sm:$0xf]
  %v30 = vld [vmem:[%s1 + $0x1c] sm:$0xf]
  %v31 = vld [vmem:[%s1 + $0x20] sm:$0xf]
  %v32 = vld [vmem:[%s1 + $0x24] sm:$0xf]
  %v33 = vld [vmem:[%s1 + $0x28] sm:$0xf]
  %v34 = vld [vmem:[%s1 + $0x2c] sm:$0xf]
  %v35 = vld [vmem:[%s1 + $0x30] sm:$0xf]
  %v36 = vld [vmem:[%s1 + $0x34] sm:$0xf]
  %v37 = vld [vmem:[%s1 + $0x38] sm:$0xf]
  %v38 = vld [vmem:[%s1 + $0x3c] sm:$0xf]
  %v39 = vld [vmem:[%s1 + $0x40] sm:$0xf]
  %v40 = vld [vmem:[%s1 + $0x44] sm:$0xf]
  %v41 = vld [vmem:[%s1 + $0x48] sm:$0xf]
  %v42 = vld [vmem:[%s1 + $0x4c] sm:$0xf]
  %v43 = vld [vmem:[%s1 + $0x50] sm:$0xf]
  %v44 = vld [vmem:[%s1 + $0x54] sm:$0xf]
  %v45 = vld [vmem:[%s1 + $0x58] sm:$0xf]
  %v46 = vld [vmem:[%s1 + $0x5c] sm:$0xf]
  %v47 = vld [vmem:[%s1 + $0x60] sm:$0xf]
  %v48 = vld [vmem:[%s1 + $0x64] sm:$0xf]
  %v49 = vld [vmem:[%s1 + $0x68] sm:$0xf]
  %v50 = vld [vmem:[%s1 + $0x6c] sm:$0xf]
  %v51 = vld [vmem:[%s1 + $0x70] sm:$0xf]
  %v52 = vld [vmem:[%s1 + $0x74] sm:$0xf]
  %v53 = vld [vmem:[%s1 + $0x78] sm:$0xf]
  %v54 = vld [vmem:[%s1 + $0x7c] sm:$0xf]
  %v55 = vlaneseq
  %v56 = vshrl.u32 %v55, 7
  %v57 = vsub.s32 0, %v56
  %v58 = vrot.slane %v19, %v57
  %v61 = vunpack.c.l.s4 1966171168
  %v62 = vunpack.c.0.s8 %v61
  %v63 = vlaneseq
  %v64 = vshrl.u32 %v63, 7
  %v65 = vsub.s32 %v62, %v64
  %v66 = vrot.slane %v18, %v65
  %v67 = vcombine.high %v66, %v66
  %v69 = vunpack.c.l.s4 1966171168
  %v70 = vunpack.c.0.s8 %v69
  %v71 = vlaneseq
  %v72 = vshrl.u32 %v71, 7
  %v73 = vsub.s32 %v70, %v72
  %v74 = vrot.slane %v66, %v73
  %v76 = vunpack.c.l.s4 1966171168
  %v77 = vunpack.c.0.s8 %v76
  %v78 = vlaneseq
  %v79 = vshrl.u32 %v78, 7
  %v80 = vsub.s32 %v77, %v79
  %v81 = vrot.slane %v67, %v80
  %v116 = vunpack.c.l.b16 %v23
  %v117 = vunpack.c.l.b16 %v24
  %v118 = vunpack.c.l.b16 %v25
  %v119 = vunpack.c.l.b16 %v26
  %v120 = vunpack.c.l.b16 %v27
  %v121 = vunpack.c.l.b16 %v28
  %v122 = vunpack.c.l.b16 %v29
  %v123 = vunpack.c.l.b16 %v30
  %v124 = vunpack.c.l.b16 %v31
  %v125 = vunpack.c.l.b16 %v32
  %v126 = vunpack.c.l.b16 %v33
  %v127 = vunpack.c.l.b16 %v34
  %v128 = vunpack.c.l.b16 %v35
  %v129 = vunpack.c.l.b16 %v36
  %v130 = vunpack.c.l.b16 %v37
  %v131 = vunpack.c.l.b16 %v38
  %v132 = vunpack.c.l.b16 %v39
  %v133 = vunpack.c.l.b16 %v40
  %v134 = vunpack.c.l.b16 %v41
  %v135 = vunpack.c.l.b16 %v42
  %v136 = vunpack.c.l.b16 %v43
  %v137 = vunpack.c.l.b16 %v44
  %v138 = vunpack.c.l.b16 %v45
  %v139 = vunpack.c.l.b16 %v46
  %v140 = vunpack.c.l.b16 %v47
  %v141 = vunpack.c.l.b16 %v48
  %v142 = vunpack.c.l.b16 %v49
  %v143 = vunpack.c.l.b16 %v50
  %v144 = vunpack.c.l.b16 %v51
  %v145 = vunpack.c.l.b16 %v52
  %v146 = vunpack.c.l.b16 %v53
  %v147 = vunpack.c.l.b16 %v54
  %v148 = vpack.c.b16 %v117, %v116
  %v149 = vpack.c.b16 %v119, %v118
  %v150 = vpack.c.b16 %v121, %v120
  %v151 = vpack.c.b16 %v123, %v122
  %v152 = vpack.c.b16 %v125, %v124
  %v153 = vpack.c.b16 %v127, %v126
  %v154 = vpack.c.b16 %v129, %v128
  %v155 = vpack.c.b16 %v131, %v130
  %v156 = vpack.c.b16 %v133, %v132
  %v157 = vpack.c.b16 %v135, %v134
  %v158 = vpack.c.b16 %v137, %v136
  %v159 = vpack.c.b16 %v139, %v138
  %v160 = vpack.c.b16 %v141, %v140
  %v161 = vpack.c.b16 %v143, %v142
  %v162 = vpack.c.b16 %v145, %v144
  %v163 = vpack.c.b16 %v147, %v146
  %180 = vmatprep.subr.bf16.mxu0 0
  %181 = vmatpush1.bf16.msra.mxu0 %v148
  %182 = vmatprep.subr.bf16.mxu0 0
  %183 = vmatpush1.bf16.msra.mxu0 %v149
  %184 = vmatprep.subr.bf16.mxu0 0
  %185 = vmatpush1.bf16.msra.mxu0 %v150
  %186 = vmatprep.subr.bf16.mxu0 0
  %187 = vmatpush1.bf16.msra.mxu0 %v151
  %188 = vmatprep.subr.bf16.mxu0 0
  %189 = vmatpush1.bf16.msra.mxu0 %v152
  %190 = vmatprep.subr.bf16.mxu0 0
  %191 = vmatpush1.bf16.msra.mxu0 %v153
  %192 = vmatprep.subr.bf16.mxu0 0
  %193 = vmatpush1.bf16.msra.mxu0 %v154
  %194 = vmatprep.subr.bf16.mxu0 0
  %195 = vmatpush1.bf16.msra.mxu0 %v155
  %196 = vmatprep.subr.bf16.mxu0 0
  %197 = vmatpush1.bf16.msra.mxu0 %v156
  %198 = vmatprep.subr.bf16.mxu0 0
  %199 = vmatpush1.bf16.msra.mxu0 %v157
  %200 = vmatprep.subr.bf16.mxu0 0
  %201 = vmatpush1.bf16.msra.mxu0 %v158
  %202 = vmatprep.subr.bf16.mxu0 0
  %203 = vmatpush1.bf16.msra.mxu0 %v159
  %204 = vmatprep.subr.bf16.mxu0 0
  %205 = vmatpush1.bf16.msra.mxu0 %v160
  %206 = vmatprep.subr.bf16.mxu0 0
  %207 = vmatpush1.bf16.msra.mxu0 %v161
  %208 = vmatprep.subr.bf16.mxu0 0
  %209 = vmatpush1.bf16.msra.mxu0 %v162
  %210 = vmatprep.subr.bf16.mxu0 0
  %211 = vmatpush1.bf16.msra.mxu0 %v163
  %212 = vmatprep.mubr.bf16.mxu0 %v81
  %213 = vmatmul.mubr.bf16.gmra.mrb[0].mxu0 %v74
  %v214 = vpop.f32.mrb[0].mxu0
  %v215 = vadd.f32 %v58, %v214
  %v216 = vpop.f32.mrb[0].mxu0
  %v217 = vpop.f32.mrb[0].mxu0
  %v218 = vpop.f32.mrb[0].mxu0
  %219 = vdwg.mxu0
  %vm220 = vcmp.gt.f32.partialorder %v215, 0.0
  %v221 = vmul.f32 %v215, 0.2
  %v222 = vsel %vm220, %v215, %v221
  %v223 = vpack.c.bf16 %v222, %v222
  %v224 = vld [vmem:[%s2] sm:$0xf]
  %v225 = vld [vmem:[%s2 + $0x4] sm:$0xf]
  %v226 = vld [vmem:[%s2 + $0x8] sm:$0xf]
  %v227 = vld [vmem:[%s2 + $0xc] sm:$0xf]
  %v228 = vlaneseq
  %v229 = vshrl.u32 %v228, 7
  %v230 = vsub.s32 0, %v229
  %v231 = vrot.slane %v20, %v230
  %v236 = vunpack.c.l.b16 %v224
  %v237 = vunpack.c.l.b16 %v225
  %v238 = vunpack.c.l.b16 %v226
  %v239 = vunpack.c.l.b16 %v227
  %v240 = vpack.c.b16 %v237, %v236
  %v241 = vpack.c.b16 %v239, %v238
  %vm244 = vcmask 261120
  %v246 = vsel %vm244, %v223, 0
  %248 = vmatprep.subr.bf16.mxu0 0
  %249 = vmatpush1.bf16.msra.mxu0 %v240
  %250 = vmatprep.subr.bf16.mxu0 0
  %251 = vmatpush1.bf16.msra.mxu0 %v241
  %252 = vmatprep.subr.bf16.mxu0 0
  %253 = vmatpush1.bf16.msra.mxu0 0
  %254 = vmatprep.subr.bf16.mxu0 0
  %255 = vmatpush1.bf16.msra.mxu0 0
  %256 = vmatprep.subr.bf16.mxu0 0
  %257 = vmatpush1.bf16.msra.mxu0 0
  %258 = vmatprep.subr.bf16.mxu0 0
  %259 = vmatpush1.bf16.msra.mxu0 0
  %260 = vmatprep.subr.bf16.mxu0 0
  %261 = vmatpush1.bf16.msra.mxu0 0
  %262 = vmatprep.subr.bf16.mxu0 0
  %263 = vmatpush1.bf16.msra.mxu0 0
  %264 = vmatprep.subr.bf16.mxu0 0
  %265 = vmatpush1.bf16.msra.mxu0 0
  %266 = vmatprep.subr.bf16.mxu0 0
  %267 = vmatpush1.bf16.msra.mxu0 0
  %268 = vmatprep.subr.bf16.mxu0 0
  %269 = vmatpush1.bf16.msra.mxu0 0
  %270 = vmatprep.subr.bf16.mxu0 0
  %271 = vmatpush1.bf16.msra.mxu0 0
  %272 = vmatprep.subr.bf16.mxu0 0
  %273 = vmatpush1.bf16.msra.mxu0 0
  %274 = vmatprep.subr.bf16.mxu0 0
  %275 = vmatpush1.bf16.msra.mxu0 0
  %276 = vmatprep.subr.bf16.mxu0 0
  %277 = vmatpush1.bf16.msra.mxu0 0
  %278 = vmatprep.subr.bf16.mxu0 0
  %279 = vmatpush1.bf16.msra.mxu0 0
  %280 = vmatprep.mubr.bf16.mxu0 0
  %281 = vmatmul.mubr.bf16.gmra.mrb[0].mxu0 %v246
  %v282 = vpop.f32.mrb[0].mxu0
  %v283 = vadd.f32 %v231, %v282
  %v284 = vpop.f32.mrb[0].mxu0
  %v285 = vpop.f32.mrb[0].mxu0
  %v286 = vpop.f32.mrb[0].mxu0
  %287 = vdwg.mxu0
  %vm288 = vcmp.gt.f32.partialorder %v283, 0.0
  %v289 = vmul.f32 %v283, 0.2
  %v290 = vsel %vm288, %v283, %v289
  %v291 = vlaneseq
  %v292 = vshrl.u32 %v291, 7
  %v293 = vsub.s32 0, %v292
  %v294 = vrot.slane %v21, %v293
  %v295 = vmul.f32 %v290, %v294
  %vm296 = vcmask 254976
  %v297 = vsel %vm296, %v295, 0.0
  %298 = vadd.xlane.f32.xlu0 %v297
  %v299 = vpop.xlane.xlu0 %298
  %v300 = vlaneseq
  %v301 = vshrl.u32 %v300, 7
  %v302 = vsub.s32 0, %v301
  %v303 = vrot.slane %v22, %v302
  %v304 = vadd.f32 %v299, %v303
  %306 = vset.pattern.permute.xlu0 0
  %307 = vperm.xlu0 %306, %v304
  %v308 = vpop.permute.xlu0 %307
  %310 = vst [vmem:[%s4] sm:$0x3] %v308
  // Predicated region
  $region18: #{discriminator_forward.1} parent=0 // pred_check
    _
  $region19: #{discriminator_forward.1} parent=0 // pred_check_branch
    %312 = sbr.rel (0) target = $region21
  $region20: #{discriminator_forward.1} parent=0 // pred_region
    _
  $region21: #{discriminator_forward.1} parent=0 // pred_fallthru
    _
  // Predicated region
  $region22: #{discriminator_forward.1} parent=0 // pred_check
    _
  $region23: #{discriminator_forward.1} parent=0 // pred_check_branch
    %314 = sbr.rel (0) target = $region25
  $region24: #{discriminator_forward.1} parent=0 // pred_region
    _
  $region25: #{discriminator_forward.1} parent=0 // pred_fallthru
    _

</llo_original>
